<compile_context>
chip_gen: v7x
topology: tpu7x:2x2x1
jax: 0.10.0
libtpu: 0.0.40
codegen_flags: <defaults>
</compile_context>

<pallas_src>
import jax
import jax.numpy as jnp
from jax.experimental import pallas as pl
from jax.experimental.pallas import tpu as pltpu


# ------------------------------ Pallas kernel ------------------------------ #
def _pooler_kernel(x_ref, w_ref, b_ref, o_ref):
    # x: (tm, Din)  w: (Din, tn)  b: (1, tn)  ->  o: (tm, tn)
    acc = jnp.dot(x_ref[...], w_ref[...], preferred_element_type=jnp.float32)
    o_ref[...] = jnp.tanh(acc + b_ref[...]).astype(o_ref.dtype)


# ------------------------------- Tiling logic ------------------------------ #
def _num_tensorcores():
    """Best-effort count of TensorCores per device (megacore chips have 2)."""
    try:
        kind = jax.devices()[0].device_kind.lower()
    except Exception:
        return 1
    if "v5e" in kind or "lite" in kind or "v6" in kind:
        return 1
    if "v4" in kind or "v5p" in kind or "v7" in kind or "7x" in kind:
        return 2
    return 1


def _choose_tiles(n, din, dout, x_itemsize, w_itemsize, out_itemsize, num_tc):
    # Out-feature tile: whole extent on single-TC chips (one j tile, minimal
    # per-step overhead); on dual-TC chips split evenly in two lane-dense
    # halves so the parallel axis shards W across both cores.
    if num_tc >= 2 and dout >= 256 and dout % 256 == 0:
        tn = dout // 2
    else:
        tn = dout

    # Row tile: full extent -> single pass over W (weight-stationary).  Only
    # halve it (keeping a multiple of 8 for sublane alignment) if the
    # double-buffered working set would blow the ~30 MiB budget, which also
    # fits v7x's 64 MiB-per-TC VMEM.
    def working_set(tm_):
        return 2 * (tm_ * din * x_itemsize
                    + din * tn * w_itemsize
                    + tn * 4
                    + tm_ * tn * out_itemsize)

    budget = 30 * 1024 * 1024
    tm = n
    while tm > 8 and working_set(tm) > budget:
        tm = -(-tm // 2)              # ceil halve
        tm = ((tm + 7) // 8) * 8      # multiple of 8 (second-minor alignment)

    return tm, tn, working_set(tm)


# ------------------------------ Fused wrapper ------------------------------ #
def linear_tanh(x, w, b, *, out_dtype=jnp.float32):
    """o = tanh(x @ w + b); weight-stationary fused matmul + bias + tanh."""
    n, din = x.shape
    dout = w.shape[1]

    x_isz = jnp.dtype(x.dtype).itemsize
    w_isz = jnp.dtype(w.dtype).itemsize
    o_isz = jnp.dtype(out_dtype).itemsize

    tm, tn, ws = _choose_tiles(n, din, dout, x_isz, w_isz, o_isz,
                               _num_tensorcores())

    gi = pl.cdiv(n, tm)       # row tiles (inner axis)
    gj = pl.cdiv(dout, tn)    # out-feature tiles (outer, weight-stationary)

    vmem_limit = int(min(48 * 2**20, max(16 * 2**20, ws + (4 << 20))))

    cost = pl.CostEstimate(
        flops=2 * n * din * dout,
        transcendentals=n * dout,
        bytes_accessed=(n * din * x_isz + din * dout * w_isz
                        + dout * 4 + n * dout * o_isz),
    )

    return pl.pallas_call(
        _pooler_kernel,
        out_shape=jax.ShapeDtypeStruct((n, dout), out_dtype),
        # Grid order (j outer, i inner): the W block index (0, j) only changes
        # on the outer axis, so each W tile is fetched from HBM exactly once.
        grid=(gj, gi),
        in_specs=[
            pl.BlockSpec((tm, din), lambda j, i: (i, 0)),   # x (small, re-read per j)
            pl.BlockSpec((din, tn), lambda j, i: (0, j)),   # W (stationary per j)
            pl.BlockSpec((1, tn), lambda j, i: (0, j)),     # bias
        ],
        out_specs=pl.BlockSpec((tm, tn), lambda j, i: (i, j)),
        compiler_params=pltpu.CompilerParams(
            dimension_semantics=("parallel", "arbitrary"),
            vmem_limit_bytes=vmem_limit,
        ),
        cost_estimate=cost,
    )(x, w, b.reshape(1, dout).astype(jnp.float32))


# -------------------------------- Module ----------------------------------- #
def init_params(key, hidden_size):
    # Matches torch.nn.Linear default init; weight stored transposed (in, out).
    kw, kb = jax.random.split(key, 2)
    bound = 1.0 / (hidden_size ** 0.5)
    w = jax.random.uniform(kw, (hidden_size, hidden_size), jnp.float32, -bound, bound)
    b = jax.random.uniform(kb, (hidden_size,), jnp.float32, -bound, bound)
    return dict(w=w, b=b)


def bert_pooler(params, hidden_states, *, compute_dtype=jnp.bfloat16,
                out_dtype=jnp.float32):
    """pooled = tanh(Linear(hidden_states[:, 0])).

    compute_dtype: dtype of the matmul inputs (x AND W) fed to the MXU;
    defaults to bfloat16 on every TPU generation (f32 accumulate + f32
    bias/tanh keep the error small).  Pass None for a pure-f32 path.
    """
    B, S, H = hidden_states.shape
    w, b = params["w"], params["b"]
    assert w.shape == (H, H)

    # First-token selection: XLA strided slice reads only B*H elements of HBM.
    first = hidden_states[:, 0, :]

    if compute_dtype is not None:
        first = first.astype(compute_dtype)
        w = w.astype(compute_dtype)

    return linear_tanh(first, w, b, out_dtype=out_dtype)


# --------------------------------- Test ------------------------------------ #
if __name__ == "__main__":
    root = jax.random.PRNGKey(0)
    kp, kx, kp2, kx2 = jax.random.split(root, 4)

    # --- small smoke test: batch=2, seq=8, hidden=32 ---
    B, S, H = 2, 8, 32
    params = init_params(kp, H)
    hidden_states = jax.random.normal(kx, (B, S, H), jnp.float32)
    ref = jnp.tanh(hidden_states[:, 0, :] @ params["w"] + params["b"])

    pooled_f32 = bert_pooler(params, hidden_states, compute_dtype=None)
    jax.block_until_ready(pooled_f32)
    assert pooled_f32.shape == (B, H)
    assert jnp.allclose(pooled_f32, ref, atol=1e-4, rtol=1e-4)

    pooled_bf16 = bert_pooler(params, hidden_states)   # default bf16 path
    jax.block_until_ready(pooled_bf16)
    assert jnp.allclose(pooled_bf16, ref, atol=5e-2, rtol=5e-2)

    # --- BERT-base-sized weights, non-power-of-two batch: exercises the real
    #     tiling (out-feature split on dual-TC chips, cdiv grid, lane-dense
    #     stores, full-extent row tile that is not a multiple of 8) ---
    B2, S2, H2 = 6, 4, 768
    params2 = init_params(kp2, H2)
    hs2 = jax.random.normal(kx2, (B2, S2, H2), jnp.float32)
    ref2 = jnp.tanh(
        jnp.dot(hs2[:, 0, :], params2["w"], precision=jax.lax.Precision.HIGHEST)
        + params2["b"])

    out2_bf16 = bert_pooler(params2, hs2)              # default bf16 path
    jax.block_until_ready(out2_bf16)
    assert out2_bf16.shape == (B2, H2)
    assert jnp.allclose(out2_bf16, ref2, atol=5e-2, rtol=5e-2)

    out2_f32 = bert_pooler(params2, hs2, compute_dtype=None)
    jax.block_until_ready(out2_f32)
    assert jnp.allclose(out2_f32, ref2, atol=2e-3, rtol=2e-3)

    print("KERNEL_OK")
</pallas_src>

<mosaic_0001>
module attributes {stable_mosaic.version = 11 : i64} {
  func.func @_pooler_kernel(%arg0: i32, %arg1: i32, %arg2: memref<2x32xf32, #tpu.memory_space<vmem>>, %arg3: memref<32x32xf32, #tpu.memory_space<vmem>>, %arg4: memref<1x32xf32, #tpu.memory_space<vmem>>, %arg5: memref<2x32xf32, #tpu.memory_space<vmem>>) attributes {dimension_semantics = [#tpu.dimension_semantics<parallel>, #tpu.dimension_semantics<arbitrary>], iteration_bounds = array<i64: 1, 1>, scalar_prefetch = 0 : i64, scratch_operands = 0 : i64, tpu.core_type = #tpu.core_type<tc>, window_params = [{transform_indices = @transform_0, window_bounds = array<i64: 2, 32>}, {transform_indices = @transform_1, window_bounds = array<i64: 32, 32>}, {transform_indices = @transform_2, window_bounds = array<i64: 1, 32>}, {transform_indices = @transform_3, window_bounds = array<i64: 2, 32>}]} {
    %c0 = arith.constant 0 : index
    %c0_0 = arith.constant 0 : index
    %0 = vector.load %arg2[%c0, %c0_0] : memref<2x32xf32, #tpu.memory_space<vmem>>, vector<2x32xf32>
    %c0_1 = arith.constant 0 : index
    %c0_2 = arith.constant 0 : index
    %1 = vector.load %arg3[%c0_1, %c0_2] : memref<32x32xf32, #tpu.memory_space<vmem>>, vector<32x32xf32>
    %cst = arith.constant dense<0.000000e+00> : vector<2x32xf32>
    %2 = tpu.matmul %0, %1, %cst {dimension_numbers = #tpu.dot_dimension_numbers<[1], [0], [0], [1], [0, 0, 1, 1], [], []>} : vector<2x32xf32>, vector<32x32xf32>, vector<2x32xf32> -> vector<2x32xf32>
    %c0_3 = arith.constant 0 : index
    %c0_4 = arith.constant 0 : index
    %3 = vector.load %arg4[%c0_3, %c0_4] : memref<1x32xf32, #tpu.memory_space<vmem>>, vector<1x32xf32>
    %4 = vector.broadcast %3 : vector<1x32xf32> to vector<2x32xf32>
    %5 = arith.addf %2, %4 : vector<2x32xf32>
    %6 = math.tanh %5 : vector<2x32xf32>
    %c0_5 = arith.constant 0 : index
    %c0_6 = arith.constant 0 : index
    %7 = vector.load %arg5[%c0_5, %c0_6] : memref<2x32xf32, #tpu.memory_space<vmem>>, vector<2x32xf32>
    tpu.vector_store %arg5[%c0_5, %c0_6], %6 {strides = array<i32>} : memref<2x32xf32, #tpu.memory_space<vmem>>, vector<2x32xf32>,
    return
  }
  func.func @transform_0(%arg0: i32, %arg1: i32) -> (i32, i32) {
    %c0_i32 = arith.constant 0 : i32
    %c0_i32_0 = arith.constant 0 : i32
    return %arg1, %c0_i32 : i32, i32
  }
  func.func @transform_1(%arg0: i32, %arg1: i32) -> (i32, i32) {
    %c0_i32 = arith.constant 0 : i32
    %c0_i32_0 = arith.constant 0 : i32
    return %c0_i32, %arg0 : i32, i32
  }
  func.func @transform_2(%arg0: i32, %arg1: i32) -> (i32, i32) {
    %c0_i32 = arith.constant 0 : i32
    %c0_i32_0 = arith.constant 0 : i32
    return %c0_i32, %arg0 : i32, i32
  }
  func.func @transform_3(%arg0: i32, %arg1: i32) -> (i32, i32) {
    %c0_i32 = arith.constant 0 : i32
    return %arg1, %arg0 : i32, i32
  }
}

</mosaic_0001>

<llo_original>
// kernel: tpu_custom_call.1
$region0: #{tpu_custom_call.1}
  #allocation0 [shape = 'u32[]', space=smem, size = 0x4, offset = 0x4, fixed_abs, tag = 'smem constant byte address 0x4 - core index']
  #allocation1 [shape = 'u32[144,128]{1,0:T(1,128)}', space=vmem, size = 0x12000, scoped, tag = 'internal scratch']
  %s0 = inlined_call_operand.hbm [shape: f32[2,32], index: 0, kind: input, shape index: {}]
  %s1 = inlined_call_operand.hbm [shape: f32[32,32], index: 1, kind: input, shape index: {}]
  %s2 = inlined_call_operand.vmem [shape: f32[1,32], index: 2, kind: input, shape index: {}]
  %s3 = inlined_call_operand.hbm [shape: f32[2,32], index: 3, kind: output, shape index: {}]
  %s4 = sld [smem:[#allocation0]]
  $region30: #{tpu_custom_call.1} parent=0
    _
  %s6 = ssub.s32 1, %s4
  %s7 = scalar_select 0, %s6, %s4
  $region1: #{tpu_custom_call.1} parent=0
    #allocation2 [shape = 'u8[1024]{0}', space=vmem, size = 0x400, scoped, tag = 'input window, operand 0, single buffered']
    #allocation3 [shape = 's32[1]{0}', space=sflag, size = 0x4, scoped, tag = 'scoped memory for tpu_custom_call.1']
    #allocation4 [shape = 's32[1]{0}', space=sflag, size = 0x4, scoped, tag = 'scoped memory for tpu_custom_call.1']
    #allocation5 [shape = 'u8[16384]{0}', space=vmem, size = 0x4000, scoped, tag = 'input window, operand 1, single buffered']
    #allocation6 [shape = 's32[1]{0}', space=sflag, size = 0x4, scoped, tag = 'scoped memory for tpu_custom_call.1']
    #allocation7 [shape = 'u8[1024]{0}', space=vmem, size = 0x400, scoped, tag = 'output window, operand 0, single buffered']
    %8 = vsyncpa [#allocation3], 0
    %9 = vsyncpa [#allocation6], 0
    %10 = vsyncpa [#allocation4], 0
    // Predicated region
    $region2: #{tpu_custom_call.1} parent=1 // pred_check
      _
    $region3: #{tpu_custom_call.1} parent=1 // pred_check_branch
      %12 = sbr.rel (0) target = $region5
    $region4: #{tpu_custom_call.1} parent=1 // pred_region
      %s14 = ssub.s32 32, 32
      %15 = vsyncadd [#allocation3], %s14
      %s17 = sshll.u32 [#allocation2], 4
      %s18 = int_to_ptr.vmem [resolvable:$true] %s17
      %20 = dma.hbm_to_vmem [thread:$0]  %s0, 32, %s18, [#allocation3]
    $region5: #{tpu_custom_call.1} parent=1 // pred_fallthru
      _
    // Predicated region
    $region6: #{tpu_custom_call.1} parent=1 // pred_check
      _
    $region7: #{tpu_custom_call.1} parent=1 // pred_check_branch
      %22 = sbr.rel (0) target = $region9
    $region8: #{tpu_custom_call.1} parent=1 // pred_region
      %s24 = ssub.s32 512, 512
      %25 = vsyncadd [#allocation6], %s24
      %s26 = sshll.u32 [#allocation5], 4
      %s27 = int_to_ptr.vmem [resolvable:$true] %s26
      %32 = dma.hbm_to_vmem [thread:$0]  %s1, 512, %s27, [#allocation6], 128, 128, 8
    $region9: #{tpu_custom_call.1} parent=1 // pred_fallthru
      _
    // Predicated region
    $region10: #{tpu_custom_call.1} parent=1 // pred_check
      _
    $region11: #{tpu_custom_call.1} parent=1 // pred_check_branch
      %34 = sbr.rel (0) target = $region13
    $region12: #{tpu_custom_call.1} parent=1 // pred_region
      _
    $region13: #{tpu_custom_call.1} parent=1 // pred_fallthru
      _
    // Predicated region
    $region14: #{tpu_custom_call.1} parent=1 // pred_check
      _
    $region15: #{tpu_custom_call.1} parent=1 // pred_check_branch
      %36 = sbr.rel (0) target = $region17
    $region16: #{tpu_custom_call.1} parent=1 // pred_region
      %37 = dma.done [#allocation3], 32
    $region17: #{tpu_custom_call.1} parent=1 // pred_fallthru
      _
    // Predicated region
    $region18: #{tpu_custom_call.1} parent=1 // pred_check
      _
    $region19: #{tpu_custom_call.1} parent=1 // pred_check_branch
      %39 = sbr.rel (0) target = $region21
    $region20: #{tpu_custom_call.1} parent=1 // pred_region
      %40 = dma.done [#allocation6], 512
    $region21: #{tpu_custom_call.1} parent=1 // pred_fallthru
      _
    %v41 = vld [vmem:[#allocation2] sm:$0x3]
    %v42 = vld [vmem:[#allocation5] sm:$0xff]
    %v43 = vld [vmem:[#allocation5 + $0x8] sm:$0xff]
    %v44 = vld [vmem:[#allocation5 + $0x10] sm:$0xff]
    %v45 = vld [vmem:[#allocation5 + $0x18] sm:$0xff]
    %v46 = vld [vmem:[%s2] sm:$0x1]
    %v48 = vlaneseq
    %v49 = vshrl.u32 %v48, 7
    %v50 = vsub.s32 0, %v49
    %v51 = vrot.slane %v46, %v50
    %vm53 = vcmask 261120
    %v55 = vsel %vm53, %v41, 0
    %57 = vmatprep.subr.mxu0 0.0
    %58 = vmatpush1.msra.mxu0 %v42
    %59 = vmatprep.subr.mxu0 0.0
    %60 = vmatpush1.msra.mxu0 %v43
    %61 = vmatprep.subr.mxu0 0.0
    %62 = vmatpush1.msra.mxu0 %v44
    %63 = vmatprep.subr.mxu0 0.0
    %64 = vmatpush1.msra.mxu0 %v45
    %65 = vmatprep.subr.mxu0 0.0
    %66 = vmatpush1.msra.mxu0 0.0
    %67 = vmatprep.subr.mxu0 0.0
    %68 = vmatpush1.msra.mxu0 0.0
    %69 = vmatprep.subr.mxu0 0.0
    %70 = vmatpush1.msra.mxu0 0.0
    %71 = vmatprep.subr.mxu0 0.0
    %72 = vmatpush1.msra.mxu0 0.0
    %73 = vmatprep.subr.mxu0 0.0
    %74 = vmatpush1.msra.mxu0 0.0
    %75 = vmatprep.subr.mxu0 0.0
    %76 = vmatpush1.msra.mxu0 0.0
    %77 = vmatprep.subr.mxu0 0.0
    %78 = vmatpush1.msra.mxu0 0.0
    %79 = vmatprep.subr.mxu0 0.0
    %80 = vmatpush1.msra.mxu0 0.0
    %81 = vmatprep.subr.mxu0 0.0
    %82 = vmatpush1.msra.mxu0 0.0
    %83 = vmatprep.subr.mxu0 0.0
    %84 = vmatpush1.msra.mxu0 0.0
    %85 = vmatprep.subr.mxu0 0.0
    %86 = vmatpush1.msra.mxu0 0.0
    %87 = vmatprep.subr.mxu0 0.0
    %88 = vmatpush1.msra.mxu0 0.0
    %89 = vmatprep.subr.mxu0 0.0
    %90 = vmatpush1.msra.mxu0 0.0
    %91 = vmatprep.subr.mxu0 0.0
    %92 = vmatpush1.msra.mxu0 0.0
    %93 = vmatprep.subr.mxu0 0.0
    %94 = vmatpush1.msra.mxu0 0.0
    %95 = vmatprep.subr.mxu0 0.0
    %96 = vmatpush1.msra.mxu0 0.0
    %97 = vmatprep.subr.mxu0 0.0
    %98 = vmatpush1.msra.mxu0 0.0
    %99 = vmatprep.subr.mxu0 0.0
    %100 = vmatpush1.msra.mxu0 0.0
    %101 = vmatprep.subr.mxu0 0.0
    %102 = vmatpush1.msra.mxu0 0.0
    %103 = vmatprep.subr.mxu0 0.0
    %104 = vmatpush1.msra.mxu0 0.0
    %105 = vmatprep.subr.mxu0 0.0
    %106 = vmatpush1.msra.mxu0 0.0
    %107 = vmatprep.subr.mxu0 0.0
    %108 = vmatpush1.msra.mxu0 0.0
    %109 = vmatprep.subr.mxu0 0.0
    %110 = vmatpush1.msra.mxu0 0.0
    %111 = vmatprep.subr.mxu0 0.0
    %112 = vmatpush1.msra.mxu0 0.0
    %113 = vmatprep.subr.mxu0 0.0
    %114 = vmatpush1.msra.mxu0 0.0
    %115 = vmatprep.subr.mxu0 0.0
    %116 = vmatpush1.msra.mxu0 0.0
    %117 = vmatprep.subr.mxu0 0.0
    %118 = vmatpush1.msra.mxu0 0.0
    %119 = vmatprep.subr.mxu0 0.0
    %120 = vmatpush1.msra.mxu0 0.0
    %121 = vmatprep.mubr.f32.mxu0 0.0
    %122 = vmatmul.mubr.f32.gmra.mrb[0].mxu0 %v55
    %v123 = vpop.f32.mrb[0].mxu0
    %v124 = vadd.f32 %v51, %v123
    %v125 = vpop.f32.mrb[0].mxu0
    %126 = vdwg.mxu0
    %v127 = vtanh.pop %v124
    %vm128 = vcmask 254976
    %129 = vst.msk [vmem:[#allocation7] sm:$0x3] %vm128, %v127
    // Predicated region
    $region22: #{tpu_custom_call.1} parent=1 // pred_check
      _
    $region23: #{tpu_custom_call.1} parent=1 // pred_check_branch
      %131 = sbr.rel (0) target = $region25
    $region24: #{tpu_custom_call.1} parent=1 // pred_region
      %s133 = ssub.s32 32, 32
      %134 = vsyncadd [#allocation4], %s133
      %s136 = sshll.u32 [#allocation7], 4
      %s137 = int_to_ptr.vmem [resolvable:$true] %s136
      %139 = dma.vmem_to_hbm [thread:$0]  %s137, 32, %s3, [#allocation4]
    $region25: #{tpu_custom_call.1} parent=1 // pred_fallthru
      _
    // Predicated region
    $region26: #{tpu_custom_call.1} parent=1 // pred_check
      _
    $region27: #{tpu_custom_call.1} parent=1 // pred_check_branch
      %141 = sbr.rel (0) target = $region29
    $region28: #{tpu_custom_call.1} parent=1 // pred_region
      %142 = dma.done [#allocation4], 32
    $region29: #{tpu_custom_call.1} parent=1 // pred_fallthru
      _
    %143 = vsyncpa [#allocation3], 1
    %144 = vsyncpa [#allocation6], 1
    %145 = vsyncpa [#allocation4], 1

</llo_original>
